<compile_context>
chip_gen: v5e
topology: v5e:2x2
jax: 0.10.0
libtpu: 0.0.40
codegen_flags: <defaults>
</compile_context>

<pallas_src>
import jax
import jax.numpy as jnp
from jax.experimental import pallas as pl
from jax.experimental.pallas import tpu as pltpu


def net2_kernel(xt_ref, wt_ref, b_ref, yt_ref):
    """Per lane tile: Yt = Wt @ Xt + b_col (one MXU matmul + one free VPU add).

    Batch sits on the lane axis, so the output last dim is lane-dense:
    unmasked stores, no 20->128 lane padding, long contiguous HBM rows.
    """
    acc = jnp.dot(wt_ref[...], xt_ref[...], preferred_element_type=jnp.float32)
    yt_ref[...] = (acc + b_ref[...]).astype(yt_ref.dtype)


def _fold_affine(weights, biases, lb, ub, n, d_in):
    """Collapse normalization + the activation-free linear chain.

    Returns
      w_aug : (d_in + r, d_out)  weight for the augmented input [X, C]
      c     : (n, r)             low-rank column factors of the per-row bias quirk
      b_col : (d_out, 1)         batch-independent bias (one value per output feature)
    such that  Y == [X, C] @ w_aug + b_col.T  (broadcast over batch rows),
    reproducing (up to fp associativity) the source forward
      H = 2*(X - lb)/(ub - lb) - 1
      H = H @ W[l].T + b[l]   for l in [1 .. num_layers-3] and the last layer,
    including the (out, 1) per-ROW bias broadcast quirk (the broadcast_to below
    raises for illegal batch sizes, exactly like the torch source would).
    Every shape here is tiny (<= hidden_width^2); this runs once, outside the kernel.
    """
    f32 = jnp.float32
    used = list(range(1, len(weights)))                     # loop layers 1..L-3 plus weights[-1]
    wts = [jnp.asarray(weights[l], f32).T for l in used]    # F.linear applies W.T: (in, out)
    bs = [jnp.asarray(biases[l], f32) for l in used]        # each (width, 1): per-ROW add quirk

    lb = jnp.asarray(lb, f32)
    ub = jnp.asarray(ub, f32)
    # H0 = X*s + t (if ub == lb this yields inf/nan, exactly like the source module).
    s_row = jnp.broadcast_to(2.0 / (ub - lb), (1, d_in))
    t_row = jnp.broadcast_to(-(2.0 * lb / (ub - lb) + 1.0), (1, d_in))

    w_eff = s_row.T * wts[0]                                # (X*s) @ W1t == X @ (s_col * W1t)
    b_row = t_row @ wts[0]                                  # batch-independent row term (1, width)
    cols, rows = [], []                                     # per-row bias = sum_k cols[k] @ rows[k]
    cols.append(jnp.broadcast_to(bs[0], (n, 1)))            # per-row add: needs n == len(b) (or 1)
    rows.append(jnp.ones((1, wts[0].shape[1]), f32))
    for wt, b in zip(wts[1:], bs[1:]):
        w_eff = w_eff @ wt
        b_row = b_row @ wt
        rows = [r @ wt for r in rows]
        cols.append(jnp.broadcast_to(b, (n, 1)))
        rows.append(jnp.ones((1, wt.shape[1]), f32))

    w_aug = jnp.concatenate([w_eff, jnp.concatenate(rows, axis=0)], axis=0)   # (d_in + r, d_out)
    c = jnp.concatenate(cols, axis=1)                                         # (n, r)
    return w_aug, c, b_row.T                                                  # b_col: (d_out, 1)


def net2_forward(x, weights, biases, lb, ub, *, tile_n=8192, use_pallas=None):
    """Forward pass of Net2 (as written in the PyTorch source).

    use_pallas: None = auto (XLA fast path for n <= 512), True/False to force a path.
    """
    n, d_in = x.shape
    out_dtype = x.dtype

    w_aug, c, b_col = _fold_affine(weights, biases, lb, ub, n, d_in)
    d_aug, d_out = w_aug.shape
    x_aug = jnp.concatenate([x.astype(jnp.float32), c], axis=1)   # (n, d_in + r)

    if use_pallas is None:
        use_pallas = n > 512
    if not use_pallas:
        # Small-n fast path: a single fused XLA dot beats the pallas launch/DMA setup.
        return (x_aug @ w_aug + b_col.T).astype(out_dtype)

    # Transposed, lane-dense layout: batch on the lane axis (done once, outside kernel).
    xt = x_aug.T                       # (d_aug, n)
    wt = w_aug.T                       # (d_out, d_aug)   tiny, VMEM-resident

    # Lane tiling: full-extent block for small n, else big lane-dense tiles (mult of 128).
    # A (d_aug, tn) f32 tile is ~sublane-pad(d_aug)*tn*4 B (~1 MiB at tn=8192), well under
    # scoped-VMEM defaults on v5e/v6e/v7x even double-buffered.  n > tile_n => grid >= 2,
    # so the "parallel" axis actually feeds both v7x TensorCores.
    tn = n if n <= tile_n else tile_n
    grid = (pl.cdiv(n, tn),)

    itemsize = jnp.dtype(out_dtype).itemsize
    cost = pl.CostEstimate(
        flops=2 * n * d_aug * d_out,
        transcendentals=0,
        bytes_accessed=int(xt.size * 4 + wt.size * 4 + b_col.size * 4 + n * d_out * itemsize),
    )

    yt = pl.pallas_call(
        net2_kernel,
        out_shape=jax.ShapeDtypeStruct((d_out, n), out_dtype),
        grid_spec=pltpu.PrefetchScalarGridSpec(
            num_scalar_prefetch=0,
            grid=grid,
            in_specs=[
                pl.BlockSpec((d_aug, tn), lambda j: (0, j)),     # Xt: streamed, lane-dense
                pl.BlockSpec((d_out, d_aug), lambda j: (0, 0)),  # Wt: VMEM-resident
                pl.BlockSpec((d_out, 1), lambda j: (0, 0)),      # per-feature bias column
            ],
            out_specs=pl.BlockSpec((d_out, tn), lambda j: (0, j)),
        ),
        compiler_params=pltpu.CompilerParams(
            dimension_semantics=("parallel",),   # shard lane tiles across TCs (v7x megacore)
        ),
        cost_estimate=cost,
    )(xt, wt, b_col)

    # Callers that can consume Y^T directly should skip this transpose (pure layout).
    return yt.T


def xavier_normal(key, in_dim, out_dim):
    # Matches nn.init.xavier_normal_ (gain=1): std = sqrt(2/(fan_in+fan_out))
    std = (2.0 / (in_dim + out_dim)) ** 0.5
    return std * jax.random.normal(key, (in_dim, out_dim), dtype=jnp.float32)


def init_net2(key, layers):
    weights, biases = [], []
    for l in range(len(layers) - 1):
        key, sub = jax.random.split(key)
        weights.append(xavier_normal(sub, layers[l], layers[l + 1]))
        biases.append(jnp.zeros((layers[l + 1], 1), dtype=jnp.float32))
    return weights, biases


def reference_forward(x, weights, biases, lb, ub):
    """Pure-JAX reference written exactly like the PyTorch forward."""
    h = 2.0 * (x - lb) / (ub - lb) - 1.0
    num_layers = len(weights) + 1
    for l in range(1, num_layers - 2):
        h = h @ weights[l].T + biases[l]
    return h @ weights[-1].T + biases[-1]


if __name__ == "__main__":
    # Demo-consistent layer widths (see TODO(synk) above).
    layers = [2, 20, 20, 20, 20, 20]
    key = jax.random.PRNGKey(0)
    weights, biases = init_net2(key, layers)

    # Batch must equal the hidden width (20) for the (out, 1) bias broadcast,
    # and X's feature dim must equal weights[1]'s in_features (= layers[2] = 20).
    n = 20
    x = jax.random.normal(jax.random.fold_in(key, 123), (n, layers[2]), dtype=jnp.float32)

    # Case 1: module constants lb=[-1], ub=[1] and zero-initialized biases (as in source).
    # Case 2: non-trivial lb/ub and non-zero biases, exercising the normalization fold and
    #         the low-rank per-row-bias (extra input columns) path.
    biases_nz = [b + 0.01 * (l + 1) for l, b in enumerate(biases)]
    cases = [
        (jnp.array([[-1.0]], jnp.float32), jnp.array([[1.0]], jnp.float32), biases),
        (jnp.array([[-1.5]], jnp.float32), jnp.array([[2.0]], jnp.float32), biases_nz),
    ]

    # Tolerance is loose because the algebraic fold changes fp associativity and the MXU's
    # default f32 dot precision differs from the layer-by-layer reference.
    for lb, ub, bs in cases:
        y_ref = reference_forward(x, weights, bs, lb, ub)

        # Pallas path (forced: n=20 would otherwise take the XLA fast path).
        y = jax.block_until_ready(net2_forward(x, weights, bs, lb, ub, use_pallas=True))
        assert y.shape == y_ref.shape, (y.shape, y_ref.shape)
        assert y.dtype == y_ref.dtype, (y.dtype, y_ref.dtype)
        assert jnp.allclose(y, y_ref, rtol=5e-2, atol=5e-2), float(jnp.max(jnp.abs(y - y_ref)))

        # Small-n XLA fast path (default routing for this shape).
        y_fast = jax.block_until_ready(net2_forward(x, weights, bs, lb, ub))
        assert jnp.allclose(y_fast, y_ref, rtol=5e-2, atol=5e-2), float(
            jnp.max(jnp.abs(y_fast - y_ref))
        )

    print("KERNEL_OK")
</pallas_src>

<mosaic_0001>
module attributes {stable_mosaic.version = 11 : i64} {
  func.func @net2_kernel(%arg0: i32, %arg1: memref<24x20xf32, #tpu.memory_space<vmem>>, %arg2: memref<20x24xf32, #tpu.memory_space<vmem>>, %arg3: memref<20x1xf32, #tpu.memory_space<vmem>>, %arg4: memref<20x20xf32, #tpu.memory_space<vmem>>) attributes {dimension_semantics = [#tpu.dimension_semantics<parallel>], iteration_bounds = array<i64: 1>, scalar_prefetch = 0 : i64, scratch_operands = 0 : i64, tpu.core_type = #tpu.core_type<tc>, window_params = [{transform_indices = @transform_0, window_bounds = array<i64: 24, 20>}, {pipeline_mode = #tpu.pipeline_mode<synchronous>, transform_indices = @transform_1, window_bounds = array<i64: 20, 24>}, {pipeline_mode = #tpu.pipeline_mode<synchronous>, transform_indices = @transform_2, window_bounds = array<i64: 20, 1>}, {transform_indices = @transform_3, window_bounds = array<i64: 20, 20>}]} {
    %c0 = arith.constant 0 : index
    %c0_0 = arith.constant 0 : index
    %0 = vector.load %arg2[%c0, %c0_0] : memref<20x24xf32, #tpu.memory_space<vmem>>, vector<20x24xf32>
    %c0_1 = arith.constant 0 : index
    %c0_2 = arith.constant 0 : index
    %1 = vector.load %arg1[%c0_1, %c0_2] : memref<24x20xf32, #tpu.memory_space<vmem>>, vector<24x20xf32>
    %cst = arith.constant dense<0.000000e+00> : vector<20x20xf32>
    %2 = tpu.matmul %0, %1, %cst {dimension_numbers = #tpu.dot_dimension_numbers<[1], [0], [0], [1], [0, 0, 1, 1], [], []>} : vector<20x24xf32>, vector<24x20xf32>, vector<20x20xf32> -> vector<20x20xf32>
    %c0_3 = arith.constant 0 : index
    %c0_4 = arith.constant 0 : index
    %3 = vector.load %arg3[%c0_3, %c0_4] : memref<20x1xf32, #tpu.memory_space<vmem>>, vector<20x1xf32>
    %4 = vector.broadcast %3 : vector<20x1xf32> to vector<20x20xf32>
    %5 = arith.addf %2, %4 : vector<20x20xf32>
    %c0_5 = arith.constant 0 : index
    %c0_6 = arith.constant 0 : index
    %6 = vector.load %arg4[%c0_5, %c0_6] : memref<20x20xf32, #tpu.memory_space<vmem>>, vector<20x20xf32>
    tpu.vector_store %arg4[%c0_5, %c0_6], %5 {strides = array<i32>} : memref<20x20xf32, #tpu.memory_space<vmem>>, vector<20x20xf32>,
    return
  }
  func.func @transform_0(%arg0: i32) -> (i32, i32) {
    %c0_i32 = arith.constant 0 : i32
    %c0_i32_0 = arith.constant 0 : i32
    return %c0_i32, %arg0 : i32, i32
  }
  func.func @transform_1(%arg0: i32) -> (i32, i32) {
    %c0_i32 = arith.constant 0 : i32
    %c0_i32_0 = arith.constant 0 : i32
    %c0_i32_1 = arith.constant 0 : i32
    return %c0_i32, %c0_i32_0 : i32, i32
  }
  func.func @transform_2(%arg0: i32) -> (i32, i32) {
    %c0_i32 = arith.constant 0 : i32
    %c0_i32_0 = arith.constant 0 : i32
    %c0_i32_1 = arith.constant 0 : i32
    return %c0_i32, %c0_i32_0 : i32, i32
  }
  func.func @transform_3(%arg0: i32) -> (i32, i32) {
    %c0_i32 = arith.constant 0 : i32
    %c0_i32_0 = arith.constant 0 : i32
    return %c0_i32, %arg0 : i32, i32
  }
}

</mosaic_0001>

<llo_original>
// kernel: tpu_custom_call.1
$region0: #{tpu_custom_call.1}
  #allocation0 [shape = 'u32[]', space=smem, size = 0x4, offset = 0x4, fixed_abs, tag = 'smem constant byte address 0x4 - core index']
  #allocation1 [shape = 'u32[72,128]{1,0:T(1,128)}', space=vmem, size = 0x9000, scoped, tag = 'internal scratch']
  %s0 = inlined_call_operand.vmem [shape: f32[24,20], index: 0, kind: input, shape index: {}]
  %s1 = inlined_call_operand.hbm [shape: f32[20,24], index: 1, kind: input, shape index: {}]
  %s2 = inlined_call_operand.vmem [shape: f32[20,1], index: 2, kind: input, shape index: {}]
  %s3 = inlined_call_operand.hbm [shape: f32[20,20], index: 3, kind: output, shape index: {}]
  %s4 = sld [smem:[#allocation0]]
  $region26: #{tpu_custom_call.1} parent=0
    _
  %s6 = ssub.s32 1, %s4
  %s7 = scalar_select 0, %s6, %s4
  $region1: #{tpu_custom_call.1} parent=0
    #allocation2 [shape = 'u8[12288]{0}', space=vmem, size = 0x3000, scoped, tag = 'input window, operand 1, single buffered']
    #allocation3 [shape = 's32[1]{0}', space=sflag, size = 0x4, scoped, tag = 'scoped memory for tpu_custom_call.1']
    #allocation4 [shape = 's32[1]{0}', space=sflag, size = 0x4, scoped, tag = 'scoped memory for tpu_custom_call.1']
    #allocation5 [shape = 'u8[12288]{0}', space=vmem, size = 0x3000, scoped, tag = 'output window, operand 0, single buffered']
    %8 = vsyncpa [#allocation3], 0
    %9 = vsyncpa [#allocation4], 0
    // Predicated region
    $region2: #{tpu_custom_call.1} parent=1 // pred_check
      _
    $region3: #{tpu_custom_call.1} parent=1 // pred_check_branch
      %11 = sbr.rel (0) target = $region5
    $region4: #{tpu_custom_call.1} parent=1 // pred_region
      _
    $region5: #{tpu_custom_call.1} parent=1 // pred_fallthru
      _
    // Predicated region
    $region6: #{tpu_custom_call.1} parent=1 // pred_check
      _
    $region7: #{tpu_custom_call.1} parent=1 // pred_check_branch
      %13 = sbr.rel (0) target = $region9
    $region8: #{tpu_custom_call.1} parent=1 // pred_region
      %15 = vsyncadd [#allocation3], 0
      %s16 = sshll.u32 %s1, 4
      %s17 = int_to_ptr.hbm [resolvable:$true] %s16
      %s18 = sshll.u32 [#allocation2], 4
      %s19 = int_to_ptr.vmem [resolvable:$true] %s18
      %24 = dma.hbm_to_vmem [thread:$0]  %s17, 384, %s19, [#allocation3], 128, 128, 8
    $region9: #{tpu_custom_call.1} parent=1 // pred_fallthru
      _
    // Predicated region
    $region10: #{tpu_custom_call.1} parent=1 // pred_check
      _
    $region11: #{tpu_custom_call.1} parent=1 // pred_check_branch
      %26 = sbr.rel (0) target = $region13
    $region12: #{tpu_custom_call.1} parent=1 // pred_region
      _
    $region13: #{tpu_custom_call.1} parent=1 // pred_fallthru
      _
    // Predicated region
    $region14: #{tpu_custom_call.1} parent=1 // pred_check
      _
    $region15: #{tpu_custom_call.1} parent=1 // pred_check_branch
      %28 = sbr.rel (0) target = $region17
    $region16: #{tpu_custom_call.1} parent=1 // pred_region
      %30 = dma.done [#allocation3], 384
    $region17: #{tpu_custom_call.1} parent=1 // pred_fallthru
      _
    %v31 = vld [vmem:[#allocation2] sm:$0xff]
    %v32 = vld [vmem:[#allocation2 + $0x8] sm:$0xff]
    %v33 = vld [vmem:[#allocation2 + $0x10] sm:$0xf]
    %v34 = vld [vmem:[%s0] sm:$0xff]
    %v35 = vld [vmem:[%s0 + $0x8] sm:$0xff]
    %v36 = vld [vmem:[%s0 + $0x10] sm:$0xff]
    %v37 = vld [vmem:[%s2] sm:$0xff]
    %v38 = vld [vmem:[%s2 + $0x8] sm:$0xff]
    %v39 = vld [vmem:[%s2 + $0x10] sm:$0xf]
    %41 = vset.pattern.permute.xlu0 0
    %42 = vperm.xlu0 %41, %v37
    %v43 = vpop.permute.xlu0 %42
    %46 = vset.pattern.permute.xlu0 0
    %47 = vperm.xlu0 %46, %v38
    %v48 = vpop.permute.xlu0 %47
    %51 = vset.pattern.permute.xlu0 0
    %52 = vperm.xlu0 %51, %v39
    %v53 = vpop.permute.xlu0 %52
    %vm55 = vcmask 195584
    %v57 = vsel %vm55, %v31, 0
    %v60 = vsel %vm55, %v32, 0
    %v63 = vsel %vm55, %v33, 0
    %65 = vmatpush.msra.mxu0 0.0
    %66 = vmatpush.msra.mxu0 0.0
    %67 = vmatpush.msra.mxu0 0.0
    %68 = vmatpush.msra.mxu0 0.0
    %69 = vmatpush.msra.mxu0 0.0
    %70 = vmatpush.msra.mxu0 0.0
    %71 = vmatpush.msra.mxu0 0.0
    %72 = vmatpush.msra.mxu0 0.0
    %73 = vmatpush.msra.mxu0 0.0
    %74 = vmatpush.msra.mxu0 0.0
    %75 = vmatpush.msra.mxu0 0.0
    %76 = vmatpush.msra.mxu0 0.0
    %77 = vmatpush.msra.mxu0 0.0
    %78 = vmatpush.msra.mxu0 %v36
    %79 = vmatpush.msra.mxu0 %v35
    %80 = vmatpush.msra.mxu0 %v34
    %81 = vmatmul.f32.gmra.mxu0 %v57
    %v82 = vpop.f32.mrf.mxu0
    %v83 = vadd.f32 %v43, %v82
    %84 = vmatmul.f32.gmra.mxu0 %v60
    %v85 = vpop.f32.mrf.mxu0
    %v86 = vadd.f32 %v48, %v85
    %87 = vmatmul.f32.gmra.mxu0 %v63
    %v88 = vpop.f32.mrf.mxu0
    %v89 = vadd.f32 %v53, %v88
    %90 = vdwg.mxu0
    %vm91 = vcmask 162816
    %92 = vst.msk [vmem:[#allocation5] sm:$0xff] %vm91, %v83
    %93 = vst.msk [vmem:[#allocation5 + $0x8] sm:$0xff] %vm91, %v86
    %vm94 = vcmask 158720
    %95 = vst.msk [vmem:[#allocation5 + $0x10] sm:$0xf] %vm94, %v89
    // Predicated region
    $region18: #{tpu_custom_call.1} parent=1 // pred_check
      _
    $region19: #{tpu_custom_call.1} parent=1 // pred_check_branch
      %97 = sbr.rel (0) target = $region21
    $region20: #{tpu_custom_call.1} parent=1 // pred_region
      %99 = vsyncadd [#allocation4], 0
      %s100 = sshll.u32 [#allocation5], 4
      %s101 = int_to_ptr.vmem [resolvable:$true] %s100
      %s102 = sshll.u32 %s3, 4
      %s103 = int_to_ptr.hbm [resolvable:$true] %s102
      %108 = dma.vmem_to_hbm [thread:$0]  %s101, 384, %s103, [#allocation4], 128, 128, 8
    $region21: #{tpu_custom_call.1} parent=1 // pred_fallthru
      _
    // Predicated region
    $region22: #{tpu_custom_call.1} parent=1 // pred_check
      _
    $region23: #{tpu_custom_call.1} parent=1 // pred_check_branch
      %110 = sbr.rel (0) target = $region25
    $region24: #{tpu_custom_call.1} parent=1 // pred_region
      %112 = dma.done [#allocation4], 384
    $region25: #{tpu_custom_call.1} parent=1 // pred_fallthru
      _
    %113 = vsyncpa [#allocation3], 1
    %114 = vsyncpa [#allocation4], 1

</llo_original>
